<compile_context>
chip_gen: v6e
topology: v6e:2x2x1
jax: 0.10.0
libtpu: 0.0.40
codegen_flags: <defaults>
</compile_context>

<pallas_src>
import jax
import jax.numpy as jnp
from jax.experimental import pallas as pl
from jax.experimental.pallas import tpu as pltpu

_SUBLANE = 8
_LANE = 128


def _round_up(n, m):
    return (n + m - 1) // m * m


def _rnn_cell_kernel(xh_ref, w_ref, b_ref, out_ref):
    # One fused MXU matmul ([x|h] @ [[W1],[Wr]]) with f32 accumulation,
    # a single folded-bias add (VPU), sigmoid (EUP), lane-dense store.
    pre = jnp.dot(xh_ref[...], w_ref[...], preferred_element_type=jnp.float32)
    out_ref[...] = jax.nn.sigmoid(pre + b_ref[...]).astype(out_ref.dtype)


def prepare_params(w1, b1, wr, br):
    """One-time parameter fold (NOT per-call work).

    w1:(D_in,H) b1:(1,H) wr:(H,H) br:(1,H)  -> fused, zero-padded:
      w_fused:(K_pad, H_pad)   with K = D_in + H
      b_fused:(1, H_pad)       with b_fused = b1 + br
    """
    d_in, hid = w1.shape
    k = d_in + hid
    k_pad = _round_up(k, _LANE)      # contraction dim (lanes of the [x|h] slab)
    h_pad = _round_up(hid, _LANE)    # output dim -> unmasked, lane-dense stores
    w = jnp.concatenate([w1, wr], axis=0)                 # (K, H)
    w = jnp.pad(w, ((0, k_pad - k), (0, h_pad - hid)))    # (K_pad, H_pad)
    b = (b1 + br).reshape(1, hid)
    b = jnp.pad(b, ((0, 0), (0, h_pad - hid)))            # (1, H_pad)
    return w, b


@jax.jit
def rnn_cell_forward(x, h, w_fused, b_fused):
    """x:(B,D_in)  h:(B,H)  w_fused:(K_pad,H_pad)  b_fused:(1,H_pad) -> (h_new, h_new)."""
    b_rows, d_in = x.shape
    _, hid = h.shape
    k = d_in + hid
    k_pad, h_pad = w_fused.shape
    b_pad = _round_up(b_rows, _SUBLANE)

    # Build the fused [x | h] activation slab, zero-padded to aligned shape.
    xh = jnp.concatenate([x, h], axis=1)                          # (B, K)
    xh = jnp.pad(xh, ((0, b_pad - b_rows), (0, k_pad - k)))       # (B_pad, K_pad)

    out = pl.pallas_call(
        _rnn_cell_kernel,
        out_shape=jax.ShapeDtypeStruct((b_pad, h_pad), x.dtype),
        in_specs=[
            pl.BlockSpec(memory_space=pltpu.MemorySpace.VMEM),    # xh
            pl.BlockSpec(memory_space=pltpu.MemorySpace.VMEM),    # fused weight
            pl.BlockSpec(memory_space=pltpu.MemorySpace.VMEM),    # fused bias
        ],
        out_specs=pl.BlockSpec(memory_space=pltpu.MemorySpace.VMEM),
    )(xh, w_fused, b_fused)

    h_new = out[:b_rows, :hid]
    # PyTorch module returns (h, h)
    return h_new, h_new


def _reference(x, h, w1, b1, wr, br):
    return jax.nn.sigmoid(x @ w1 + b1 + h @ wr + br)


if __name__ == "__main__":
    key = jax.random.PRNGKey(0)
    B = 4
    input_length = 3
    hidden_length = 20

    k1, k2, k3, k4, k5, k6 = jax.random.split(key, 6)
    # Deterministic synthetic parameters; weights stored transposed vs nn.Linear
    # (i.e. (in_features, out_features)) so forward is x @ W + b.
    x = jax.random.normal(k1, (B, input_length), dtype=jnp.float32)
    h = jax.random.normal(k2, (B, hidden_length), dtype=jnp.float32)
    w1 = jax.random.normal(k3, (input_length, hidden_length), dtype=jnp.float32) * 0.1
    b1 = jax.random.normal(k4, (1, hidden_length), dtype=jnp.float32) * 0.1
    wr = jax.random.normal(k5, (hidden_length, hidden_length), dtype=jnp.float32) * 0.1
    br = jax.random.normal(k6, (1, hidden_length), dtype=jnp.float32) * 0.1

    # One-time parameter fold (fused weight + fused bias).
    w_fused, b_fused = prepare_params(w1, b1, wr, br)

    h_new, h_out = rnn_cell_forward(x, h, w_fused, b_fused)
    jax.block_until_ready(h_new)

    ref = _reference(x, h, w1, b1, wr, br)
    assert h_new.shape == (B, hidden_length)
    assert jnp.allclose(h_new, ref, atol=1e-5, rtol=1e-5), "mismatch vs reference"
    assert jnp.array_equal(h_new, h_out)

    print("KERNEL_OK")
</pallas_src>

<mosaic_0001>
module attributes {stable_mosaic.version = 11 : i64} {
  func.func @_rnn_cell_kernel(%arg0: memref<8x128xf32, #tpu.memory_space<vmem>>, %arg1: memref<128x128xf32, #tpu.memory_space<vmem>>, %arg2: memref<1x128xf32, #tpu.memory_space<vmem>>, %arg3: memref<8x128xf32, #tpu.memory_space<vmem>>) attributes {dimension_semantics = [], scalar_prefetch = 0 : i64, scratch_operands = 0 : i64, tpu.core_type = #tpu.core_type<tc>} {
    %c0 = arith.constant 0 : index
    %c0_0 = arith.constant 0 : index
    %0 = vector.load %arg0[%c0, %c0_0] : memref<8x128xf32, #tpu.memory_space<vmem>>, vector<8x128xf32>
    %c0_1 = arith.constant 0 : index
    %c0_2 = arith.constant 0 : index
    %1 = vector.load %arg1[%c0_1, %c0_2] : memref<128x128xf32, #tpu.memory_space<vmem>>, vector<128x128xf32>
    %cst = arith.constant dense<0.000000e+00> : vector<8x128xf32>
    %2 = tpu.matmul %0, %1, %cst {dimension_numbers = #tpu.dot_dimension_numbers<[1], [0], [0], [1], [0, 0, 1, 1], [], []>} : vector<8x128xf32>, vector<128x128xf32>, vector<8x128xf32> -> vector<8x128xf32>
    %c0_3 = arith.constant 0 : index
    %c0_4 = arith.constant 0 : index
    %3 = vector.load %arg2[%c0_3, %c0_4] : memref<1x128xf32, #tpu.memory_space<vmem>>, vector<1x128xf32>
    %4 = vector.broadcast %3 : vector<1x128xf32> to vector<8x128xf32>
    %5 = arith.addf %2, %4 : vector<8x128xf32>
    %6 = arith.negf %5 : vector<8x128xf32>
    %7 = math.exp %6 : vector<8x128xf32>
    %cst_5 = arith.constant 1.000000e+00 : f32
    %8 = vector.broadcast %cst_5 : f32 to vector<8x128xf32>
    %9 = arith.addf %8, %7 : vector<8x128xf32>
    %10 = arith.divf %8, %9 : vector<8x128xf32>
    %c0_6 = arith.constant 0 : index
    %c0_7 = arith.constant 0 : index
    %11 = vector.load %arg3[%c0_6, %c0_7] : memref<8x128xf32, #tpu.memory_space<vmem>>, vector<8x128xf32>
    tpu.vector_store %arg3[%c0_6, %c0_7], %10 {strides = array<i32>} : memref<8x128xf32, #tpu.memory_space<vmem>>, vector<8x128xf32>,
    return
  }
}

</mosaic_0001>

<llo_original>
// kernel: rnn_cell_forward.1
$region0: #{rnn_cell_forward.1}
  #allocation0 [shape = 'u32[]', space=smem, size = 0x4, offset = 0x4, fixed_abs, tag = 'smem constant byte address 0x4 - core index']
  #allocation1 [shape = 'u32[144,128]{1,0:T(1,128)}', space=vmem, size = 0x12000, scoped, tag = 'internal scratch']
  %s0 = inlined_call_operand.vmem [shape: f32[8,128], index: 0, kind: input, shape index: {}]
  %s1 = inlined_call_operand.hbm [shape: f32[128,128], index: 1, kind: input, shape index: {}]
  %s2 = inlined_call_operand.vmem [shape: f32[1,128], index: 2, kind: input, shape index: {}]
  %s3 = inlined_call_operand.vmem [shape: f32[8,128], index: 3, kind: output, shape index: {}]
  %s4 = sld [smem:[#allocation0]]
  $region26: #{rnn_cell_forward.1} parent=0
    _
  %s6 = ssub.s32 1, %s4
  %s7 = scalar_select 0, %s6, %s4
  $region1: #{rnn_cell_forward.1} parent=0
    #allocation2 [shape = 'u8[65536]{0}', space=vmem, size = 0x10000, scoped, tag = 'input window, operand 1, single buffered']
    #allocation3 [shape = 's32[1]{0}', space=sflag, size = 0x4, scoped, tag = 'scoped memory for rnn_cell_forward.1']
    %8 = vsyncpa [#allocation3], 0
    // Predicated region
    $region2: #{rnn_cell_forward.1} parent=1 // pred_check
      _
    $region3: #{rnn_cell_forward.1} parent=1 // pred_check_branch
      %10 = sbr.rel (0) target = $region5
    $region4: #{rnn_cell_forward.1} parent=1 // pred_region
      _
    $region5: #{rnn_cell_forward.1} parent=1 // pred_fallthru
      _
    // Predicated region
    $region6: #{rnn_cell_forward.1} parent=1 // pred_check
      _
    $region7: #{rnn_cell_forward.1} parent=1 // pred_check_branch
      %12 = sbr.rel (0) target = $region9
    $region8: #{rnn_cell_forward.1} parent=1 // pred_region
      %s14 = ssub.s32 2048, 2048
      %15 = vsyncadd [#allocation3], %s14
      %s16 = sshll.u32 [#allocation2], 4
      %s17 = int_to_ptr.vmem [resolvable:$true] %s16
      %22 = dma.hbm_to_vmem [thread:$0]  %s1, 2048, %s17, [#allocation3], 128, 128, 8
    $region9: #{rnn_cell_forward.1} parent=1 // pred_fallthru
      _
    // Predicated region
    $region10: #{rnn_cell_forward.1} parent=1 // pred_check
      _
    $region11: #{rnn_cell_forward.1} parent=1 // pred_check_branch
      %24 = sbr.rel (0) target = $region13
    $region12: #{rnn_cell_forward.1} parent=1 // pred_region
      _
    $region13: #{rnn_cell_forward.1} parent=1 // pred_fallthru
      _
    // Predicated region
    $region14: #{rnn_cell_forward.1} parent=1 // pred_check
      _
    $region15: #{rnn_cell_forward.1} parent=1 // pred_check_branch
      %26 = sbr.rel (0) target = $region17
    $region16: #{rnn_cell_forward.1} parent=1 // pred_region
      %27 = dma.done [#allocation3], 2048
    $region17: #{rnn_cell_forward.1} parent=1 // pred_fallthru
      _
    %v28 = vld [vmem:[%s0] sm:$0xff]
    %v29 = vld [vmem:[#allocation2] sm:$0xff]
    %v30 = vld [vmem:[#allocation2 + $0x8] sm:$0xff]
    %v31 = vld [vmem:[#allocation2 + $0x10] sm:$0xff]
    %v32 = vld [vmem:[#allocation2 + $0x18] sm:$0xff]
    %v33 = vld [vmem:[#allocation2 + $0x20] sm:$0xff]
    %v34 = vld [vmem:[#allocation2 + $0x28] sm:$0xff]
    %v35 = vld [vmem:[#allocation2 + $0x30] sm:$0xff]
    %v36 = vld [vmem:[#allocation2 + $0x38] sm:$0xff]
    %v37 = vld [vmem:[#allocation2 + $0x40] sm:$0xff]
    %v38 = vld [vmem:[#allocation2 + $0x48] sm:$0xff]
    %v39 = vld [vmem:[#allocation2 + $0x50] sm:$0xff]
    %v40 = vld [vmem:[#allocation2 + $0x58] sm:$0xff]
    %v41 = vld [vmem:[#allocation2 + $0x60] sm:$0xff]
    %v42 = vld [vmem:[#allocation2 + $0x68] sm:$0xff]
    %v43 = vld [vmem:[#allocation2 + $0x70] sm:$0xff]
    %v44 = vld [vmem:[#allocation2 + $0x78] sm:$0xff]
    %v45 = vld [vmem:[%s2] sm:$0x1]
    %v47 = vlaneseq
    %v48 = vshrl.u32 %v47, 7
    %v49 = vsub.s32 0, %v48
    %v50 = vrot.slane %v45, %v49
    %52 = vmatprep.subr.mxu0 0.0
    %53 = vmatpush1.msra.mxu0 %v44
    %54 = vmatprep.subr.mxu0 0.0
    %55 = vmatpush1.msra.mxu0 %v43
    %56 = vmatprep.subr.mxu0 0.0
    %57 = vmatpush1.msra.mxu0 %v42
    %58 = vmatprep.subr.mxu0 0.0
    %59 = vmatpush1.msra.mxu0 %v41
    %60 = vmatprep.subr.mxu0 0.0
    %61 = vmatpush1.msra.mxu0 %v40
    %62 = vmatprep.subr.mxu0 0.0
    %63 = vmatpush1.msra.mxu0 %v39
    %64 = vmatprep.subr.mxu0 0.0
    %65 = vmatpush1.msra.mxu0 %v38
    %66 = vmatprep.subr.mxu0 0.0
    %67 = vmatpush1.msra.mxu0 %v37
    %68 = vmatprep.subr.mxu0 0.0
    %69 = vmatpush1.msra.mxu0 %v36
    %70 = vmatprep.subr.mxu0 0.0
    %71 = vmatpush1.msra.mxu0 %v35
    %72 = vmatprep.subr.mxu0 0.0
    %73 = vmatpush1.msra.mxu0 %v34
    %74 = vmatprep.subr.mxu0 0.0
    %75 = vmatpush1.msra.mxu0 %v33
    %76 = vmatprep.subr.mxu0 0.0
    %77 = vmatpush1.msra.mxu0 %v32
    %78 = vmatprep.subr.mxu0 0.0
    %79 = vmatpush1.msra.mxu0 %v31
    %80 = vmatprep.subr.mxu0 0.0
    %81 = vmatpush1.msra.mxu0 %v30
    %82 = vmatprep.subr.mxu0 0.0
    %83 = vmatpush1.msra.mxu0 %v29
    %84 = vmatprep.subr.mxu0 0.0
    %85 = vmatpush2.msra.mxu0 0.0
    %86 = vmatprep.subr.mxu0 0.0
    %87 = vmatpush2.msra.mxu0 0.0
    %88 = vmatprep.subr.mxu0 0.0
    %89 = vmatpush2.msra.mxu0 0.0
    %90 = vmatprep.subr.mxu0 0.0
    %91 = vmatpush2.msra.mxu0 0.0
    %92 = vmatprep.subr.mxu0 0.0
    %93 = vmatpush2.msra.mxu0 0.0
    %94 = vmatprep.subr.mxu0 0.0
    %95 = vmatpush2.msra.mxu0 0.0
    %96 = vmatprep.subr.mxu0 0.0
    %97 = vmatpush2.msra.mxu0 0.0
    %98 = vmatprep.subr.mxu0 0.0
    %99 = vmatpush2.msra.mxu0 0.0
    %100 = vmatprep.subr.mxu0 0.0
    %101 = vmatpush2.msra.mxu0 0.0
    %102 = vmatprep.subr.mxu0 0.0
    %103 = vmatpush2.msra.mxu0 0.0
    %104 = vmatprep.subr.mxu0 0.0
    %105 = vmatpush2.msra.mxu0 0.0
    %106 = vmatprep.subr.mxu0 0.0
    %107 = vmatpush2.msra.mxu0 0.0
    %108 = vmatprep.subr.mxu0 0.0
    %109 = vmatpush2.msra.mxu0 0.0
    %110 = vmatprep.subr.mxu0 0.0
    %111 = vmatpush2.msra.mxu0 0.0
    %112 = vmatprep.subr.mxu0 0.0
    %113 = vmatpush2.msra.mxu0 0.0
    %114 = vmatprep.subr.mxu0 0.0
    %115 = vmatpush2.msra.mxu0 0.0
    %116 = vmatprep.mubr.f32.mxu0 0.0
    %117 = vmatmul.mubr.f32.gmra.mxu0 %v28
    %v118 = vpop.f32.mrf.mxu0
    %v119 = vadd.f32 %v50, %v118
    %v120 = vpop.f32.mrf.mxu0
    %121 = vdwg.mxu0
    %v122 = vxor.u32 %v119, 2147483648
    %v123 = vmul.f32 %v122, 1.442695
    %v124 = vpow.pop %v123
    %v125 = vadd.f32 %v124, 1.0
    %v126 = vrcp.pop %v125
    %v127 = vmul.f32 1.0, %v126
    %128 = vst [vmem:[%s3] sm:$0xff] %v127
    // Predicated region
    $region18: #{rnn_cell_forward.1} parent=1 // pred_check
      _
    $region19: #{rnn_cell_forward.1} parent=1 // pred_check_branch
      %130 = sbr.rel (0) target = $region21
    $region20: #{rnn_cell_forward.1} parent=1 // pred_region
      _
    $region21: #{rnn_cell_forward.1} parent=1 // pred_fallthru
      _
    // Predicated region
    $region22: #{rnn_cell_forward.1} parent=1 // pred_check
      _
    $region23: #{rnn_cell_forward.1} parent=1 // pred_check_branch
      %132 = sbr.rel (0) target = $region25
    $region24: #{rnn_cell_forward.1} parent=1 // pred_region
      _
    $region25: #{rnn_cell_forward.1} parent=1 // pred_fallthru
      _
    %133 = vsyncpa [#allocation3], 1

</llo_original>
